<compile_context>
chip_gen: v7x
topology: tpu7x:2x2x1
jax: 0.10.0
libtpu: 0.0.40
codegen_flags: <defaults>
</compile_context>

<pallas_src>
import jax
import jax.numpy as jnp
from jax.experimental import pallas as pl
from jax.experimental.pallas import tpu as pltpu


def _ode_diffeq_kernel(t_ref, y_ref, w1t_ref, b1_ref, u1_ref, w2t_ref, b2_ref,
                       c_ref, dy_ref, neg_div_ref):
    """Transposed (batch-on-lanes) FFJORD diffeq + exact divergence.

    dy^T   = W2^T tanh(W1^T y^T + (b1 + t*u1)) + b2        (E, TB)
    -div   = - c @ sech^2(h),  c_k = sum_i W1[i,k] W2[k,i]  (1, TB)
    """
    t = t_ref[0]                                              # SMEM scalar
    yT = y_ref[...]                                           # (E, TB)
    bias = b1_ref[...] + t * u1_ref[...]                      # (H, 1) VPU FMA
    h = jnp.dot(w1t_ref[...], yT,
                preferred_element_type=jnp.float32) + bias    # (H, TB)
    a = jnp.tanh(h)                                           # (H, TB), EUP
    dy_ref[...] = (jnp.dot(w2t_ref[...], a,
                           preferred_element_type=jnp.float32)
                   + b2_ref[...])                             # (E, TB)
    sech2 = 1.0 - a * a                                       # (H, TB)
    # Exact trace contraction -> lane-dense (1, TB) row.
    neg_div_ref[...] = -jnp.dot(c_ref[...], sech2,
                                preferred_element_type=jnp.float32)


def _tensorcores_per_chip() -> int:
    """Best-effort TensorCore count per device (v7x/megacore=2, v5e/v6e=1)."""
    try:
        info = pltpu.get_tpu_info()
        for attr in ("num_cores", "core_count", "num_tensorcores"):
            v = getattr(info, attr, None)
            if isinstance(v, int) and v > 0:
                return v
    except Exception:
        pass
    try:
        kind = jax.devices()[0].device_kind.lower()
        if "7" in kind or "v5p" in kind or "v4" in kind:
            return 2
    except Exception:
        pass
    return 1


def _pick_batch_tile(batch: int, n_cores: int) -> int:
    """One big tile unless a multi-TC chip has enough work to split 2-way."""
    if n_cores >= 2 and batch >= 4096 and (batch // 2) % 128 == 0:
        return batch // 2
    return batch


def make_pallas_diffeq(w1, b1, u1, w2, b2):
    """Builds diffeq(t, yT) operating on the transposed (E, B) state layout."""
    E, H = w1.shape
    w1f = jnp.asarray(w1, jnp.float32)
    w2f = jnp.asarray(w2, jnp.float32)
    w1t = w1f.T                                      # (H, E)
    w2t = w2f.T                                      # (E, H)
    b1c = jnp.asarray(b1, jnp.float32).reshape(H, 1)
    u1c = jnp.asarray(u1, jnp.float32).reshape(H, 1)
    b2c = jnp.asarray(b2, jnp.float32).reshape(E, 1)
    # c_k = sum_i W1[i,k] * W2[k,i]  (parameter setup glue, plain JAX, once)
    c = jnp.sum(w1f * w2f.T, axis=0).reshape(1, H)

    n_tc = _tensorcores_per_chip()

    def diffeq(t, yT):
        # yT: (E, B) -- batch on the lane axis, kept transposed for the solve.
        _, B = yT.shape
        tb = _pick_batch_tile(B, n_tc)
        nb = B // tb

        t_arr = jnp.asarray(t, jnp.float32).reshape(1)

        cost = pl.CostEstimate(
            flops=4 * B * E * H + 2 * B * H,
            transcendentals=B * H,
            bytes_accessed=4 * (2 * B * E + B + 2 * E * H + 3 * H + E + 1),
        )

        dyT, neg_div = pl.pallas_call(
            _ode_diffeq_kernel,
            out_shape=(
                jax.ShapeDtypeStruct((E, B), jnp.float32),
                jax.ShapeDtypeStruct((1, B), jnp.float32),
            ),
            grid_spec=pltpu.PrefetchScalarGridSpec(
                num_scalar_prefetch=0,
                grid=(nb,),
                in_specs=[
                    pl.BlockSpec(memory_space=pltpu.MemorySpace.SMEM),  # t
                    pl.BlockSpec((E, tb), lambda i: (0, i)),            # y^T
                    pl.BlockSpec((H, E), lambda i: (0, 0)),             # W1^T
                    pl.BlockSpec((H, 1), lambda i: (0, 0)),             # b1
                    pl.BlockSpec((H, 1), lambda i: (0, 0)),             # u1
                    pl.BlockSpec((E, H), lambda i: (0, 0)),             # W2^T
                    pl.BlockSpec((E, 1), lambda i: (0, 0)),             # b2
                    pl.BlockSpec((1, H), lambda i: (0, 0)),             # trace c
                ],
                out_specs=[
                    pl.BlockSpec((E, tb), lambda i: (0, i)),            # dy^T
                    pl.BlockSpec((1, tb), lambda i: (0, i)),            # -div row
                ],
            ),
            compiler_params=pltpu.CompilerParams(
                dimension_semantics=("parallel",)),
            cost_estimate=cost,
        )(t_arr, yT.astype(jnp.float32), w1t, b1c, u1c, w2t, b2c, c)
        return dyT, neg_div

    return diffeq


# --- state-layout helpers: convert once per ODE solve, not per diffeq call ---
def to_solver_states(y, logdet, *extras):
    """PyTorch layout (B,E)/(B,1) -> lane-dense solver layout (E,B)/(1,B)."""
    return (y.T, logdet.reshape(1, -1)) + tuple(e.T for e in extras)


def from_solver_states(states):
    """Solver layout (E,B)/(1,B) -> PyTorch layout (B,E)/(B,1)."""
    return (states[0].T, states[1].reshape(-1, 1)) + tuple(
        s.T for s in states[2:])


class ODEFunctionPallas:
    """JAX/Pallas counterpart of torchflows ODEFunction.

    The solver-side state pytree is kept in the transposed, lane-dense layout
    (y^T: (event_size, batch), logdet row: (1, batch)) for the whole solve so
    no per-call transposes are emitted; use to_solver_states /
    from_solver_states at solve boundaries.
    """

    def __init__(self, diffeq):
        self.diffeq = diffeq
        # TODO(synk): like the PyTorch buffer, but under jit this Python-side
        # counter is a trace-time constant and will not count evaluations.
        self._n_evals = jnp.asarray(0.0, dtype=jnp.float32)

    def regularization(self):
        return jnp.asarray(0.0, dtype=jnp.float32)

    def before_odeint(self, **kwargs):
        self._n_evals = jnp.asarray(0.0, dtype=jnp.float32)

    def forward(self, t, states):
        # Base-class forward raises NotImplementedError in PyTorch; this is
        # the canonical FFJORD-style concrete semantics used by subclasses.
        self._n_evals = self._n_evals + 1.0
        yT = states[0]
        dyT, neg_div = self.diffeq(t, yT)
        tail = [jnp.zeros_like(s) for s in states[2:]]
        return tuple([dyT, neg_div] + tail)


if __name__ == "__main__":
    B, E, H = 256, 16, 32   # batch, event_size, hidden
    key = jax.random.PRNGKey(0)
    k1, k2, k3, k4, k5, k6 = jax.random.split(key, 6)

    w1 = jax.random.normal(k1, (E, H), jnp.float32) / jnp.sqrt(E)
    b1 = jax.random.normal(k2, (H,), jnp.float32) * 0.01
    u1 = jax.random.normal(k3, (H,), jnp.float32) * 0.1
    w2 = jax.random.normal(k4, (H, E), jnp.float32) / jnp.sqrt(H)
    b2 = jax.random.normal(k5, (E,), jnp.float32) * 0.01

    diffeq = make_pallas_diffeq(w1, b1, u1, w2, b2)
    ode_fn = ODEFunctionPallas(diffeq)
    ode_fn.before_odeint()

    # PyTorch-layout inputs, converted once to the solver layout.
    y0 = jax.random.normal(k6, (B, E), jnp.float32)
    logdet0 = jnp.zeros((B, 1), jnp.float32)
    extra0 = jnp.zeros((B, E), jnp.float32)
    t = jnp.asarray(0.5, dtype=jnp.float32)

    states = to_solver_states(y0, logdet0, extra0)
    out_states = ode_fn.forward(t, states)
    out_states = jax.block_until_ready(out_states)
    dy, neg_div, d_extra = from_solver_states(out_states)

    # correctness check vs. pure-JAX reference (PyTorch layout)
    h_ref = y0 @ w1 + b1[None, :] + 0.5 * u1[None, :]
    a_ref = jnp.tanh(h_ref)
    dy_ref = a_ref @ w2 + b2[None, :]
    c_ref = jnp.sum(w1 * w2.T, axis=0)
    div_ref = jnp.sum((1.0 - a_ref * a_ref) * c_ref[None, :],
                      axis=-1, keepdims=True)

    assert dy.shape == (B, E) and neg_div.shape == (B, 1)
    assert jnp.allclose(dy, dy_ref, atol=1e-4, rtol=1e-4)
    assert jnp.allclose(neg_div, -div_ref, atol=1e-4, rtol=1e-4)
    assert d_extra.shape == (B, E) and float(jnp.abs(d_extra).max()) == 0.0

    print("KERNEL_OK")
</pallas_src>

<mosaic_0001>
module attributes {stable_mosaic.version = 11 : i64} {
  func.func @_ode_diffeq_kernel(%arg0: i32, %arg1: memref<1xf32, #tpu.memory_space<smem>>, %arg2: memref<16x256xf32, #tpu.memory_space<vmem>>, %arg3: memref<32x16xf32, #tpu.memory_space<vmem>>, %arg4: memref<32x1xf32, #tpu.memory_space<vmem>>, %arg5: memref<32x1xf32, #tpu.memory_space<vmem>>, %arg6: memref<16x32xf32, #tpu.memory_space<vmem>>, %arg7: memref<16x1xf32, #tpu.memory_space<vmem>>, %arg8: memref<1x32xf32, #tpu.memory_space<vmem>>, %arg9: memref<16x256xf32, #tpu.memory_space<vmem>>, %arg10: memref<1x256xf32, #tpu.memory_space<vmem>>) attributes {dimension_semantics = [#tpu.dimension_semantics<parallel>], iteration_bounds = array<i64: 1>, scalar_prefetch = 0 : i64, scratch_operands = 0 : i64, tpu.core_type = #tpu.core_type<tc>, window_params = [{transform_indices = @transform_0, window_bounds = array<i64: 1>}, {transform_indices = @transform_1, window_bounds = array<i64: 16, 256>}, {pipeline_mode = #tpu.pipeline_mode<synchronous>, transform_indices = @transform_2, window_bounds = array<i64: 32, 16>}, {pipeline_mode = #tpu.pipeline_mode<synchronous>, transform_indices = @transform_3, window_bounds = array<i64: 32, 1>}, {pipeline_mode = #tpu.pipeline_mode<synchronous>, transform_indices = @transform_4, window_bounds = array<i64: 32, 1>}, {pipeline_mode = #tpu.pipeline_mode<synchronous>, transform_indices = @transform_5, window_bounds = array<i64: 16, 32>}, {pipeline_mode = #tpu.pipeline_mode<synchronous>, transform_indices = @transform_6, window_bounds = array<i64: 16, 1>}, {pipeline_mode = #tpu.pipeline_mode<synchronous>, transform_indices = @transform_7, window_bounds = array<i64: 1, 32>}, {transform_indices = @transform_8, window_bounds = array<i64: 16, 256>}, {transform_indices = @transform_9, window_bounds = array<i64: 1, 256>}]} {
    %c0 = arith.constant 0 : index
    %0 = memref.load %arg1[%c0] : memref<1xf32, #tpu.memory_space<smem>>
    %c0_0 = arith.constant 0 : index
    %c0_1 = arith.constant 0 : index
    %1 = vector.load %arg2[%c0_0, %c0_1] : memref<16x256xf32, #tpu.memory_space<vmem>>, vector<16x256xf32>
    %c0_2 = arith.constant 0 : index
    %c0_3 = arith.constant 0 : index
    %2 = vector.load %arg4[%c0_2, %c0_3] : memref<32x1xf32, #tpu.memory_space<vmem>>, vector<32x1xf32>
    %c0_4 = arith.constant 0 : index
    %c0_5 = arith.constant 0 : index
    %3 = vector.load %arg5[%c0_4, %c0_5] : memref<32x1xf32, #tpu.memory_space<vmem>>, vector<32x1xf32>
    %4 = vector.broadcast %0 : f32 to vector<32x1xf32>
    %5 = arith.mulf %4, %3 : vector<32x1xf32>
    %6 = arith.addf %2, %5 : vector<32x1xf32>
    %c0_6 = arith.constant 0 : index
    %c0_7 = arith.constant 0 : index
    %7 = vector.load %arg3[%c0_6, %c0_7] : memref<32x16xf32, #tpu.memory_space<vmem>>, vector<32x16xf32>
    %cst = arith.constant dense<0.000000e+00> : vector<32x256xf32>
    %8 = tpu.matmul %7, %1, %cst {dimension_numbers = #tpu.dot_dimension_numbers<[1], [0], [0], [1], [0, 0, 1, 1], [], []>} : vector<32x16xf32>, vector<16x256xf32>, vector<32x256xf32> -> vector<32x256xf32>
    %9 = vector.broadcast %6 : vector<32x1xf32> to vector<32x256xf32>
    %10 = arith.addf %8, %9 : vector<32x256xf32>
    %11 = math.tanh %10 : vector<32x256xf32>
    %c0_8 = arith.constant 0 : index
    %c0_9 = arith.constant 0 : index
    %12 = vector.load %arg6[%c0_8, %c0_9] : memref<16x32xf32, #tpu.memory_space<vmem>>, vector<16x32xf32>
    %cst_10 = arith.constant dense<0.000000e+00> : vector<16x256xf32>
    %13 = tpu.matmul %12, %11, %cst_10 {dimension_numbers = #tpu.dot_dimension_numbers<[1], [0], [0], [1], [0, 0, 1, 1], [], []>} : vector<16x32xf32>, vector<32x256xf32>, vector<16x256xf32> -> vector<16x256xf32>
    %c0_11 = arith.constant 0 : index
    %c0_12 = arith.constant 0 : index
    %14 = vector.load %arg7[%c0_11, %c0_12] : memref<16x1xf32, #tpu.memory_space<vmem>>, vector<16x1xf32>
    %15 = vector.broadcast %14 : vector<16x1xf32> to vector<16x256xf32>
    %16 = arith.addf %13, %15 : vector<16x256xf32>
    %c0_13 = arith.constant 0 : index
    %c0_14 = arith.constant 0 : index
    %17 = vector.load %arg9[%c0_13, %c0_14] : memref<16x256xf32, #tpu.memory_space<vmem>>, vector<16x256xf32>
    tpu.vector_store %arg9[%c0_13, %c0_14], %16 {strides = array<i32>} : memref<16x256xf32, #tpu.memory_space<vmem>>, vector<16x256xf32>,
    %18 = arith.mulf %11, %11 : vector<32x256xf32>
    %cst_15 = arith.constant 1.000000e+00 : f32
    %19 = vector.broadcast %cst_15 : f32 to vector<32x256xf32>
    %20 = arith.subf %19, %18 : vector<32x256xf32>
    %c0_16 = arith.constant 0 : index
    %c0_17 = arith.constant 0 : index
    %21 = vector.load %arg8[%c0_16, %c0_17] : memref<1x32xf32, #tpu.memory_space<vmem>>, vector<1x32xf32>
    %cst_18 = arith.constant dense<0.000000e+00> : vector<1x256xf32>
    %22 = tpu.matmul %21, %20, %cst_18 {dimension_numbers = #tpu.dot_dimension_numbers<[1], [0], [0], [1], [0, 0, 1, 1], [], []>} : vector<1x32xf32>, vector<32x256xf32>, vector<1x256xf32> -> vector<1x256xf32>
    %cst_19 = arith.constant 0.000000e+00 : f32
    %23 = vector.broadcast %cst_19 : f32 to vector<1x256xf32>
    %24 = arith.subf %23, %22 : vector<1x256xf32>
    %c0_20 = arith.constant 0 : index
    %c0_21 = arith.constant 0 : index
    %25 = vector.load %arg10[%c0_20, %c0_21] : memref<1x256xf32, #tpu.memory_space<vmem>>, vector<1x256xf32>
    tpu.vector_store %arg10[%c0_20, %c0_21], %24 {strides = array<i32>} : memref<1x256xf32, #tpu.memory_space<vmem>>, vector<1x256xf32>,
    return
  }
  func.func @transform_0(%arg0: i32) -> i32 {
    %c0_i32 = arith.constant 0 : i32
    %c0_i32_0 = arith.constant 0 : i32
    return %c0_i32 : i32
  }
  func.func @transform_1(%arg0: i32) -> (i32, i32) {
    %c0_i32 = arith.constant 0 : i32
    %c0_i32_0 = arith.constant 0 : i32
    return %c0_i32, %arg0 : i32, i32
  }
  func.func @transform_2(%arg0: i32) -> (i32, i32) {
    %c0_i32 = arith.constant 0 : i32
    %c0_i32_0 = arith.constant 0 : i32
    %c0_i32_1 = arith.constant 0 : i32
    return %c0_i32, %c0_i32_0 : i32, i32
  }
  func.func @transform_3(%arg0: i32) -> (i32, i32) {
    %c0_i32 = arith.constant 0 : i32
    %c0_i32_0 = arith.constant 0 : i32
    %c0_i32_1 = arith.constant 0 : i32
    return %c0_i32, %c0_i32_0 : i32, i32
  }
  func.func @transform_4(%arg0: i32) -> (i32, i32) {
    %c0_i32 = arith.constant 0 : i32
    %c0_i32_0 = arith.constant 0 : i32
    %c0_i32_1 = arith.constant 0 : i32
    return %c0_i32, %c0_i32_0 : i32, i32
  }
  func.func @transform_5(%arg0: i32) -> (i32, i32) {
    %c0_i32 = arith.constant 0 : i32
    %c0_i32_0 = arith.constant 0 : i32
    %c0_i32_1 = arith.constant 0 : i32
    return %c0_i32, %c0_i32_0 : i32, i32
  }
  func.func @transform_6(%arg0: i32) -> (i32, i32) {
    %c0_i32 = arith.constant 0 : i32
    %c0_i32_0 = arith.constant 0 : i32
    %c0_i32_1 = arith.constant 0 : i32
    return %c0_i32, %c0_i32_0 : i32, i32
  }
  func.func @transform_7(%arg0: i32) -> (i32, i32) {
    %c0_i32 = arith.constant 0 : i32
    %c0_i32_0 = arith.constant 0 : i32
    %c0_i32_1 = arith.constant 0 : i32
    return %c0_i32, %c0_i32_0 : i32, i32
  }
  func.func @transform_8(%arg0: i32) -> (i32, i32) {
    %c0_i32 = arith.constant 0 : i32
    %c0_i32_0 = arith.constant 0 : i32
    return %c0_i32, %arg0 : i32, i32
  }
  func.func @transform_9(%arg0: i32) -> (i32, i32) {
    %c0_i32 = arith.constant 0 : i32
    %c0_i32_0 = arith.constant 0 : i32
    return %c0_i32, %arg0 : i32, i32
  }
}

</mosaic_0001>

<llo_original>
// kernel: tpu_custom_call.1
$region0: #{tpu_custom_call.1}
  #allocation0 [shape = 'u32[]', space=smem, size = 0x4, offset = 0x4, fixed_abs, tag = 'smem constant byte address 0x4 - core index']
  #allocation1 [shape = 'u32[144,128]{1,0:T(1,128)}', space=vmem, size = 0x12000, scoped, tag = 'internal scratch']
  #allocation2 [shape = 'f32[1]{0:T(128)S(6)}', space=smem, size = 0x200, scoped, tag = 'scoped memory for tpu_custom_call.1']
  %s0 = inlined_call_operand.<no memory space> [shape: f32[1], index: 0, kind: input, shape index: {}]
  %s1 = inlined_call_operand.vmem [shape: f32[16,256], index: 1, kind: input, shape index: {}]
  %s2 = inlined_call_operand.vmem [shape: f32[32,16], index: 2, kind: input, shape index: {}]
  %s3 = inlined_call_operand.vmem [shape: f32[32,1], index: 3, kind: input, shape index: {}]
  %s4 = inlined_call_operand.vmem [shape: f32[32,1], index: 4, kind: input, shape index: {}]
  %s5 = inlined_call_operand.vmem [shape: f32[16,32], index: 5, kind: input, shape index: {}]
  %s6 = inlined_call_operand.vmem [shape: f32[16,1], index: 6, kind: input, shape index: {}]
  %s7 = inlined_call_operand.vmem [shape: f32[1,32], index: 7, kind: input, shape index: {}]
  %s8 = inlined_call_operand.hbm [shape: f32[16,256], index: 8, kind: output, shape index: {0}]
  %s9 = inlined_call_operand.hbm [shape: f32[1,256], index: 9, kind: output, shape index: {1}]
  %10 = xla_tuple %s8, %s9
  %s11 = sld [smem:[#allocation0]]
  $region50: #{tpu_custom_call.1} parent=0
    _
  %s13 = ssub.s32 1, %s11
  %s14 = scalar_select 0, %s13, %s11
  %15 = sst [smem:[#allocation2]] %s0
  $region1: #{tpu_custom_call.1} parent=0
    #allocation3 [shape = 'u8[16384]{0}', space=vmem, size = 0x4000, scoped, tag = 'output window, operand 0, single buffered']
    #allocation4 [shape = 's32[1]{0}', space=sflag, size = 0x4, scoped, tag = 'scoped memory for tpu_custom_call.1']
    #allocation5 [shape = 'u8[1024]{0}', space=vmem, size = 0x400, scoped, tag = 'output window, operand 1, single buffered']
    #allocation6 [shape = 's32[1]{0}', space=sflag, size = 0x4, scoped, tag = 'scoped memory for tpu_custom_call.1']
    %16 = vsyncpa [#allocation4], 0
    %17 = vsyncpa [#allocation6], 0
    // Predicated region
    $region2: #{tpu_custom_call.1} parent=1 // pred_check
      _
    $region3: #{tpu_custom_call.1} parent=1 // pred_check_branch
      %19 = sbr.rel (0) target = $region5
    $region4: #{tpu_custom_call.1} parent=1 // pred_region
      _
    $region5: #{tpu_custom_call.1} parent=1 // pred_fallthru
      _
    // Predicated region
    $region6: #{tpu_custom_call.1} parent=1 // pred_check
      _
    $region7: #{tpu_custom_call.1} parent=1 // pred_check_branch
      %21 = sbr.rel (0) target = $region9
    $region8: #{tpu_custom_call.1} parent=1 // pred_region
      _
    $region9: #{tpu_custom_call.1} parent=1 // pred_fallthru
      _
    // Predicated region
    $region10: #{tpu_custom_call.1} parent=1 // pred_check
      _
    $region11: #{tpu_custom_call.1} parent=1 // pred_check_branch
      %23 = sbr.rel (0) target = $region13
    $region12: #{tpu_custom_call.1} parent=1 // pred_region
      _
    $region13: #{tpu_custom_call.1} parent=1 // pred_fallthru
      _
    // Predicated region
    $region14: #{tpu_custom_call.1} parent=1 // pred_check
      _
    $region15: #{tpu_custom_call.1} parent=1 // pred_check_branch
      %25 = sbr.rel (0) target = $region17
    $region16: #{tpu_custom_call.1} parent=1 // pred_region
      _
    $region17: #{tpu_custom_call.1} parent=1 // pred_fallthru
      _
    // Predicated region
    $region18: #{tpu_custom_call.1} parent=1 // pred_check
      _
    $region19: #{tpu_custom_call.1} parent=1 // pred_check_branch
      %27 = sbr.rel (0) target = $region21
    $region20: #{tpu_custom_call.1} parent=1 // pred_region
      _
    $region21: #{tpu_custom_call.1} parent=1 // pred_fallthru
      _
    // Predicated region
    $region22: #{tpu_custom_call.1} parent=1 // pred_check
      _
    $region23: #{tpu_custom_call.1} parent=1 // pred_check_branch
      %29 = sbr.rel (0) target = $region25
    $region24: #{tpu_custom_call.1} parent=1 // pred_region
      _
    $region25: #{tpu_custom_call.1} parent=1 // pred_fallthru
      _
    // Predicated region
    $region26: #{tpu_custom_call.1} parent=1 // pred_check
      _
    $region27: #{tpu_custom_call.1} parent=1 // pred_check_branch
      %31 = sbr.rel (0) target = $region29
    $region28: #{tpu_custom_call.1} parent=1 // pred_region
      _
    $region29: #{tpu_custom_call.1} parent=1 // pred_fallthru
      _
    // Predicated region
    $region30: #{tpu_custom_call.1} parent=1 // pred_check
      _
    $region31: #{tpu_custom_call.1} parent=1 // pred_check_branch
      %33 = sbr.rel (0) target = $region33
    $region32: #{tpu_custom_call.1} parent=1 // pred_region
      _
    $region33: #{tpu_custom_call.1} parent=1 // pred_fallthru
      _
    %s34 = sld [smem:[#allocation2]]
    %v35 = vld [vmem:[%s1] sm:$0xff]
    %v36 = vld [vmem:[%s1 + $0x8] sm:$0xff]
    %v37 = vld [vmem:[%s1 + $0x10] sm:$0xff]
    %v38 = vld [vmem:[%s1 + $0x18] sm:$0xff]
    %v39 = vld [vmem:[%s3] sm:$0xff]
    %v40 = vld [vmem:[%s3 + $0x8] sm:$0xff]
    %v41 = vld [vmem:[%s3 + $0x10] sm:$0xff]
    %v42 = vld [vmem:[%s3 + $0x18] sm:$0xff]
    %v43 = vld [vmem:[%s4] sm:$0xff]
    %v44 = vld [vmem:[%s4 + $0x8] sm:$0xff]
    %v45 = vld [vmem:[%s4 + $0x10] sm:$0xff]
    %v46 = vld [vmem:[%s4 + $0x18] sm:$0xff]
    %v47 = vstv %s34
    %v48 = vmul.f32 %v47, %v43
    %v49 = vmul.f32 %v47, %v44
    %v50 = vmul.f32 %v47, %v45
    %v51 = vmul.f32 %v47, %v46
    %v52 = vadd.f32 %v39, %v48
    %v53 = vadd.f32 %v40, %v49
    %v54 = vadd.f32 %v41, %v50
    %v55 = vadd.f32 %v42, %v51
    %v56 = vld [vmem:[%s2] sm:$0xff]
    %v57 = vld [vmem:[%s2 + $0x8] sm:$0xff]
    %v58 = vld [vmem:[%s2 + $0x10] sm:$0xff]
    %v59 = vld [vmem:[%s2 + $0x18] sm:$0xff]
    %61 = vset.pattern.permute.xlu0 0
    %62 = vperm.xlu0 %61, %v52
    %v63 = vpop.permute.xlu0 %62
    %66 = vset.pattern.permute.xlu0 0
    %67 = vperm.xlu0 %66, %v53
    %v68 = vpop.permute.xlu0 %67
    %71 = vset.pattern.permute.xlu0 0
    %72 = vperm.xlu0 %71, %v54
    %v73 = vpop.permute.xlu0 %72
    %76 = vset.pattern.permute.xlu0 0
    %77 = vperm.xlu0 %76, %v55
    %v78 = vpop.permute.xlu0 %77
    %vm80 = vcmask 130048
    %v82 = vsel %vm80, %v56, 0
    %v85 = vsel %vm80, %v57, 0
    %v88 = vsel %vm80, %v58, 0
    %v91 = vsel %vm80, %v59, 0
    %93 = vmatprep.subr.mxu0 %v36
    %94 = vmatpush1.msra.mxu0 %v35
    %95 = vmatprep.subr.mxu0 %v38
    %96 = vmatpush1.msra.mxu0 %v37
    %97 = vmatprep.subr.mxu0 0.0
    %98 = vmatpush1.msra.mxu0 0.0
    %99 = vmatprep.subr.mxu0 0.0
    %100 = vmatpush1.msra.mxu0 0.0
    %101 = vmatprep.subr.mxu0 0.0
    %102 = vmatpush1.msra.mxu0 0.0
    %103 = vmatprep.subr.mxu0 0.0
    %104 = vmatpush1.msra.mxu0 0.0
    %105 = vmatprep.subr.mxu0 0.0
    %106 = vmatpush1.msra.mxu0 0.0
    %107 = vmatprep.subr.mxu0 0.0
    %108 = vmatpush1.msra.mxu0 0.0
    %109 = vmatprep.subr.mxu0 0.0
    %110 = vmatpush1.msra.mxu0 0.0
    %111 = vmatprep.subr.mxu0 0.0
    %112 = vmatpush1.msra.mxu0 0.0
    %113 = vmatprep.subr.mxu0 0.0
    %114 = vmatpush1.msra.mxu0 0.0
    %115 = vmatprep.subr.mxu0 0.0
    %116 = vmatpush1.msra.mxu0 0.0
    %117 = vmatprep.subr.mxu0 0.0
    %118 = vmatpush1.msra.mxu0 0.0
    %119 = vmatprep.subr.mxu0 0.0
    %120 = vmatpush1.msra.mxu0 0.0
    %121 = vmatprep.subr.mxu0 0.0
    %122 = vmatpush1.msra.mxu0 0.0
    %123 = vmatprep.subr.mxu0 0.0
    %124 = vmatpush1.msra.mxu0 0.0
    %125 = vmatprep.subr.mxu0 0.0
    %126 = vmatpush1.msra.mxu0 0.0
    %127 = vmatprep.subr.mxu0 0.0
    %128 = vmatpush1.msra.mxu0 0.0
    %129 = vmatprep.subr.mxu0 0.0
    %130 = vmatpush1.msra.mxu0 0.0
    %131 = vmatprep.subr.mxu0 0.0
    %132 = vmatpush1.msra.mxu0 0.0
    %133 = vmatprep.subr.mxu0 0.0
    %134 = vmatpush1.msra.mxu0 0.0
    %135 = vmatprep.subr.mxu0 0.0
    %136 = vmatpush1.msra.mxu0 0.0
    %137 = vmatprep.subr.mxu0 0.0
    %138 = vmatpush1.msra.mxu0 0.0
    %139 = vmatprep.subr.mxu0 0.0
    %140 = vmatpush1.msra.mxu0 0.0
    %141 = vmatprep.subr.mxu0 0.0
    %142 = vmatpush1.msra.mxu0 0.0
    %143 = vmatprep.subr.mxu0 0.0
    %144 = vmatpush1.msra.mxu0 0.0
    %145 = vmatprep.subr.mxu0 0.0
    %146 = vmatpush1.msra.mxu0 0.0
    %147 = vmatprep.subr.mxu0 0.0
    %148 = vmatpush1.msra.mxu0 0.0
    %149 = vmatprep.subr.mxu0 0.0
    %150 = vmatpush1.msra.mxu0 0.0
    %151 = vmatprep.subr.mxu0 0.0
    %152 = vmatpush1.msra.mxu0 0.0
    %153 = vmatprep.subr.mxu0 0.0
    %154 = vmatpush1.msra.mxu0 0.0
    %155 = vmatprep.subr.mxu0 0.0
    %156 = vmatpush1.msra.mxu0 0.0
    %157 = vmatprep.mubr.f32.mxu0 0.0
    %158 = vmatmul.mubr.f32.gmra.mrb[0].mxu0 %v82
    %v159 = vpop.f32.mrb[0].mxu0
    %v160 = vadd.f32 %v63, %v159
    %v161 = vpop.f32.mrb[0].mxu0
    %v162 = vadd.f32 %v63, %v161
    %163 = vmatprep.mubr.f32.mxu0 0.0
    %164 = vmatmul.mubr.f32.gmra.mrb[0].mxu0 %v85
    %v165 = vpop.f32.mrb[0].mxu0
    %v166 = vadd.f32 %v68, %v165
    %v167 = vpop.f32.mrb[0].mxu0
    %v168 = vadd.f32 %v68, %v167
    %169 = vmatprep.mubr.f32.mxu0 0.0
    %170 = vmatmul.mubr.f32.gmra.mrb[0].mxu0 %v88
    %v171 = vpop.f32.mrb[0].mxu0
    %v172 = vadd.f32 %v73, %v171
    %v173 = vpop.f32.mrb[0].mxu0
    %v174 = vadd.f32 %v73, %v173
    %175 = vmatprep.mubr.f32.mxu0 0.0
    %176 = vmatmul.mubr.f32.gmra.mrb[0].mxu0 %v91
    %v177 = vpop.f32.mrb[0].mxu0
    %v178 = vadd.f32 %v78, %v177
    %v179 = vpop.f32.mrb[0].mxu0
    %v180 = vadd.f32 %v78, %v179
    %181 = vdwg.mxu0
    %v182 = vtanh.pop %v160
    %v183 = vtanh.pop %v162
    %v184 = vtanh.pop %v166
    %v185 = vtanh.pop %v168
    %v186 = vtanh.pop %v172
    %v187 = vtanh.pop %v174
    %v188 = vtanh.pop %v178
    %v189 = vtanh.pop %v180
    %v190 = vld [vmem:[%s5] sm:$0xff]
    %v191 = vld [vmem:[%s5 + $0x8] sm:$0xff]
    %v192 = vld [vmem:[%s6] sm:$0xff]
    %v193 = vld [vmem:[%s6 + $0x8] sm:$0xff]
    %195 = vset.pattern.permute.xlu0 0
    %196 = vperm.xlu0 %195, %v192
    %v197 = vpop.permute.xlu0 %196
    %200 = vset.pattern.permute.xlu0 0
    %201 = vperm.xlu0 %200, %v193
    %v202 = vpop.permute.xlu0 %201
    %vm204 = vcmask 261120
    %v206 = vsel %vm204, %v190, 0
    %v209 = vsel %vm204, %v191, 0
    %211 = vmatprep.subr.mxu0 %v183
    %212 = vmatpush1.msra.mxu0 %v182
    %213 = vmatprep.subr.mxu0 %v185
    %214 = vmatpush1.msra.mxu0 %v184
    %215 = vmatprep.subr.mxu0 %v187
    %216 = vmatpush1.msra.mxu0 %v186
    %217 = vmatprep.subr.mxu0 %v189
    %218 = vmatpush1.msra.mxu0 %v188
    %219 = vmatprep.subr.mxu0 0.0
    %220 = vmatpush1.msra.mxu0 0.0
    %221 = vmatprep.subr.mxu0 0.0
    %222 = vmatpush1.msra.mxu0 0.0
    %223 = vmatprep.subr.mxu0 0.0
    %224 = vmatpush1.msra.mxu0 0.0
    %225 = vmatprep.subr.mxu0 0.0
    %226 = vmatpush1.msra.mxu0 0.0
    %227 = vmatprep.subr.mxu0 0.0
    %228 = vmatpush1.msra.mxu0 0.0
    %229 = vmatprep.subr.mxu0 0.0
    %230 = vmatpush1.msra.mxu0 0.0
    %231 = vmatprep.subr.mxu0 0.0
    %232 = vmatpush1.msra.mxu0 0.0
    %233 = vmatprep.subr.mxu0 0.0
    %234 = vmatpush1.msra.mxu0 0.0
    %235 = vmatprep.subr.mxu0 0.0
    %236 = vmatpush1.msra.mxu0 0.0
    %237 = vmatprep.subr.mxu0 0.0
    %238 = vmatpush1.msra.mxu0 0.0
    %239 = vmatprep.subr.mxu0 0.0
    %240 = vmatpush1.msra.mxu0 0.0
    %241 = vmatprep.subr.mxu0 0.0
    %242 = vmatpush1.msra.mxu0 0.0
    %243 = vmatprep.subr.mxu0 0.0
    %244 = vmatpush1.msra.mxu0 0.0
    %245 = vmatprep.subr.mxu0 0.0
    %246 = vmatpush1.msra.mxu0 0.0
    %247 = vmatprep.subr.mxu0 0.0
    %248 = vmatpush1.msra.mxu0 0.0
    %249 = vmatprep.subr.mxu0 0.0
    %250 = vmatpush1.msra.mxu0 0.0
    %251 = vmatprep.subr.mxu0 0.0
    %252 = vmatpush1.msra.mxu0 0.0
    %253 = vmatprep.subr.mxu0 0.0
    %254 = vmatpush1.msra.mxu0 0.0
    %255 = vmatprep.subr.mxu0 0.0
    %256 = vmatpush1.msra.mxu0 0.0
    %257 = vmatprep.subr.mxu0 0.0
    %258 = vmatpush1.msra.mxu0 0.0
    %259 = vmatprep.subr.mxu0 0.0
    %260 = vmatpush1.msra.mxu0 0.0
    %261 = vmatprep.subr.mxu0 0.0
    %262 = vmatpush1.msra.mxu0 0.0
    %263 = vmatprep.subr.mxu0 0.0
    %264 = vmatpush1.msra.mxu0 0.0
    %265 = vmatprep.subr.mxu0 0.0
    %266 = vmatpush1.msra.mxu0 0.0
    %267 = vmatprep.subr.mxu0 0.0
    %268 = vmatpush1.msra.mxu0 0.0
    %269 = vmatprep.subr.mxu0 0.0
    %270 = vmatpush1.msra.mxu0 0.0
    %271 = vmatprep.subr.mxu0 0.0
    %272 = vmatpush1.msra.mxu0 0.0
    %273 = vmatprep.subr.mxu0 0.0
    %274 = vmatpush1.msra.mxu0 0.0
    %275 = vmatprep.mubr.f32.mxu0 0.0
    %276 = vmatmul.mubr.f32.gmra.mrb[0].mxu0 %v206
    %v277 = vpop.f32.mrb[0].mxu0
    %v278 = vadd.f32 %v197, %v277
    %v279 = vpop.f32.mrb[0].mxu0
    %v280 = vadd.f32 %v197, %v279
    %281 = vmatprep.mubr.f32.mxu0 0.0
    %282 = vmatmul.mubr.f32.gmra.mrb[0].mxu0 %v209
    %v283 = vpop.f32.mrb[0].mxu0
    %v284 = vadd.f32 %v202, %v283
    %v285 = vpop.f32.mrb[0].mxu0
    %v286 = vadd.f32 %v202, %v285
    %287 = vdwg.mxu0
    %288 = vst [vmem:[#allocation3] sm:$0xff] %v278
    %289 = vst [vmem:[#allocation3 + $0x8] sm:$0xff] %v280
    %290 = vst [vmem:[#allocation3 + $0x10] sm:$0xff] %v284
    %291 = vst [vmem:[#allocation3 + $0x18] sm:$0xff] %v286
    %v292 = vmul.f32 %v182, %v182
    %v293 = vmul.f32 %v183, %v183
    %v294 = vmul.f32 %v184, %v184
    %v295 = vmul.f32 %v185, %v185
    %v296 = vmul.f32 %v186, %v186
    %v297 = vmul.f32 %v187, %v187
    %v298 = vmul.f32 %v188, %v188
    %v299 = vmul.f32 %v189, %v189
    %v300 = vsub.f32 1.0, %v292
    %v301 = vsub.f32 1.0, %v293
    %v302 = vsub.f32 1.0, %v294
    %v303 = vsub.f32 1.0, %v295
    %v304 = vsub.f32 1.0, %v296
    %v305 = vsub.f32 1.0, %v297
    %v306 = vsub.f32 1.0, %v298
    %v307 = vsub.f32 1.0, %v299
    %v308 = vld [vmem:[%s7] sm:$0x1]
    %v310 = vsel %vm204, %v308, 0
    %312 = vmatprep.subr.mxu0 %v301
    %313 = vmatpush1.msra.mxu0 %v300
    %314 = vmatprep.subr.mxu0 %v303
    %315 = vmatpush1.msra.mxu0 %v302
    %316 = vmatprep.subr.mxu0 %v305
    %317 = vmatpush1.msra.mxu0 %v304
    %318 = vmatprep.subr.mxu0 %v307
    %319 = vmatpush1.msra.mxu0 %v306
    %320 = vmatprep.subr.mxu0 0.0
    %321 = vmatpush1.msra.mxu0 0.0
    %322 = vmatprep.subr.mxu0 0.0
    %323 = vmatpush1.msra.mxu0 0.0
    %324 = vmatprep.subr.mxu0 0.0
    %325 = vmatpush1.msra.mxu0 0.0
    %326 = vmatprep.subr.mxu0 0.0
    %327 = vmatpush1.msra.mxu0 0.0
    %328 = vmatprep.subr.mxu0 0.0
    %329 = vmatpush1.msra.mxu0 0.0
    %330 = vmatprep.subr.mxu0 0.0
    %331 = vmatpush1.msra.mxu0 0.0
    %332 = vmatprep.subr.mxu0 0.0
    %333 = vmatpush1.msra.mxu0 0.0
    %334 = vmatprep.subr.mxu0 0.0
    %335 = vmatpush1.msra.mxu0 0.0
    %336 = vmatprep.subr.mxu0 0.0
    %337 = vmatpush1.msra.mxu0 0.0
    %338 = vmatprep.subr.mxu0 0.0
    %339 = vmatpush1.msra.mxu0 0.0
    %340 = vmatprep.subr.mxu0 0.0
    %341 = vmatpush1.msra.mxu0 0.0
    %342 = vmatprep.subr.mxu0 0.0
    %343 = vmatpush1.msra.mxu0 0.0
    %344 = vmatprep.subr.mxu0 0.0
    %345 = vmatpush1.msra.mxu0 0.0
    %346 = vmatprep.subr.mxu0 0.0
    %347 = vmatpush1.msra.mxu0 0.0
    %348 = vmatprep.subr.mxu0 0.0
    %349 = vmatpush1.msra.mxu0 0.0
    %350 = vmatprep.subr.mxu0 0.0
    %351 = vmatpush1.msra.mxu0 0.0
    %352 = vmatprep.subr.mxu0 0.0
    %353 = vmatpush1.msra.mxu0 0.0
    %354 = vmatprep.subr.mxu0 0.0
    %355 = vmatpush1.msra.mxu0 0.0
    %356 = vmatprep.subr.mxu0 0.0
    %357 = vmatpush1.msra.mxu0 0.0
    %358 = vmatprep.subr.mxu0 0.0
    %359 = vmatpush1.msra.mxu0 0.0
    %360 = vmatprep.subr.mxu0 0.0
    %361 = vmatpush1.msra.mxu0 0.0
    %362 = vmatprep.subr.mxu0 0.0
    %363 = vmatpush1.msra.mxu0 0.0
    %364 = vmatprep.subr.mxu0 0.0
    %365 = vmatpush1.msra.mxu0 0.0
    %366 = vmatprep.subr.mxu0 0.0
    %367 = vmatpush1.msra.mxu0 0.0
    %368 = vmatprep.subr.mxu0 0.0
    %369 = vmatpush1.msra.mxu0 0.0
    %370 = vmatprep.subr.mxu0 0.0
    %371 = vmatpush1.msra.mxu0 0.0
    %372 = vmatprep.subr.mxu0 0.0
    %373 = vmatpush1.msra.mxu0 0.0
    %374 = vmatprep.subr.mxu0 0.0
    %375 = vmatpush1.msra.mxu0 0.0
    %376 = vmatprep.mubr.f32.mxu0 0.0
    %377 = vmatmul.mubr.f32.gmra.mrb[0].mxu0 %v310
    %v378 = vpop.f32.mrb[0].mxu0
    %v379 = vadd.f32 0.0, %v378
    %v380 = vpop.f32.mrb[0].mxu0
    %v381 = vadd.f32 0.0, %v380
    %382 = vdwg.mxu0
    %v383 = vsub.f32 0.0, %v379
    %v384 = vsub.f32 0.0, %v381
    %v387 = vcombine.low %v383, %v384
    %v389 = vunpack.c.l.s4 1966171168
    %v390 = vunpack.c.0.s8 %v389
    %v391 = vlaneseq
    %v392 = vshrl.u32 %v391, 7
    %v393 = vsub.s32 %v390, %v392
    %v394 = vrot.slane %v387, %v393
    %v396 = vunpack.c.l.s4 1966171168
    %v397 = vunpack.c.0.s8 %v396
    %v398 = vlaneseq
    %v399 = vshrl.u32 %v398, 7
    %v400 = vsub.s32 %v397, %v399
    %v401 = vrot.slane %v394, %v400
    %v403 = vlaneseq
    %vm404 = vcmp.ge.s32.totalorder %v403, 0
    %vm405 = vcmp.lt.s32.totalorder %v403, 256
    %vm406 = vmand %vm404, %vm405
    %407 = vst.msk [vmem:[#allocation5] sm:$0x3] %vm406, %v401
    // Predicated region
    $region34: #{tpu_custom_call.1} parent=1 // pred_check
      _
    $region35: #{tpu_custom_call.1} parent=1 // pred_check_branch
      %409 = sbr.rel (0) target = $region37
    $region36: #{tpu_custom_call.1} parent=1 // pred_region
      %s411 = ssub.s32 512, 512
      %412 = vsyncadd [#allocation4], %s411
      %s413 = sshll.u32 [#allocation3], 4
      %s414 = int_to_ptr.vmem [resolvable:$true] %s413
      %419 = dma.vmem_to_hbm [thread:$0]  %s414, 512, %s8, [#allocation4], 256, 256, 16
    $region37: #{tpu_custom_call.1} parent=1 // pred_fallthru
      _
    // Predicated region
    $region38: #{tpu_custom_call.1} parent=1 // pred_check
      _
    $region39: #{tpu_custom_call.1} parent=1 // pred_check_branch
      %421 = sbr.rel (0) target = $region41
    $region40: #{tpu_custom_call.1} parent=1 // pred_region
      %s423 = ssub.s32 32, 32
      %424 = vsyncadd [#allocation6], %s423
      %s426 = sshll.u32 [#allocation5], 4
      %s427 = int_to_ptr.vmem [resolvable:$true] %s426
      %429 = dma.vmem_to_hbm [thread:$0]  %s427, 32, %s9, [#allocation6]
    $region41: #{tpu_custom_call.1} parent=1 // pred_fallthru
      _
    // Predicated region
    $region42: #{tpu_custom_call.1} parent=1 // pred_check
      _
    $region43: #{tpu_custom_call.1} parent=1 // pred_check_branch
      %431 = sbr.rel (0) target = $region45
    $region44: #{tpu_custom_call.1} parent=1 // pred_region
      %432 = dma.done [#allocation4], 512
    $region45: #{tpu_custom_call.1} parent=1 // pred_fallthru
      _
    // Predicated region
    $region46: #{tpu_custom_call.1} parent=1 // pred_check
      _
    $region47: #{tpu_custom_call.1} parent=1 // pred_check_branch
      %434 = sbr.rel (0) target = $region49
    $region48: #{tpu_custom_call.1} parent=1 // pred_region
      %435 = dma.done [#allocation6], 32
    $region49: #{tpu_custom_call.1} parent=1 // pred_fallthru
      _
    %436 = vsyncpa [#allocation4], 1
    %437 = vsyncpa [#allocation6], 1

</llo_original>
